<compile_context>
chip_gen: v7x
topology: tpu7x:2x2x1
jax: 0.10.0
libtpu: 0.0.40
codegen_flags: <defaults>
</compile_context>

<pallas_src>
import jax
import jax.numpy as jnp
from jax import lax
from jax.experimental import pallas as pl
from jax.experimental.pallas import tpu as pltpu


def _round_up(x, m):
    return (x + m - 1) // m * m


def _vmem_capacity_bytes():
    """Per-core VMEM capacity; conservative 64 MiB fallback (v7x per-TC)."""
    try:
        info = pltpu.get_tpu_info()
        cap = getattr(info, "vmem_capacity_bytes", None)
        if cap:
            return int(cap)
    except Exception:
        pass
    return 64 * 1024 * 1024


def _make_single_pass_kernel(mxu_dtype, precision):
    # gk == 1: whole contraction in one tile -> no accumulator scratch, no
    # epilogue copy; dot + bias written straight to the output tile.
    def kernel(x_ref, w_ref, b_ref, o_ref):
        a = x_ref[...]
        w = w_ref[...]
        if mxu_dtype is not None:
            a = a.astype(mxu_dtype)
            w = w.astype(mxu_dtype)
        acc = jnp.dot(a, w, preferred_element_type=jnp.float32,
                      precision=precision)
        o_ref[...] = (acc + b_ref[...].astype(jnp.float32)).astype(o_ref.dtype)

    return kernel


def _make_ksplit_kernel(mxu_dtype, precision):
    # gk > 1: resident f32 accumulator across the (innermost) K grid axis.
    def kernel(x_ref, w_ref, b_ref, o_ref, acc_ref):
        k = pl.program_id(2)

        @pl.when(k == 0)
        def _():
            acc_ref[...] = jnp.zeros_like(acc_ref)

        a = x_ref[...]
        w = w_ref[...]
        if mxu_dtype is not None:
            a = a.astype(mxu_dtype)
            w = w.astype(mxu_dtype)
        acc_ref[...] += jnp.dot(a, w, preferred_element_type=jnp.float32,
                                precision=precision)

        @pl.when(k == pl.num_programs(2) - 1)
        def _():
            o_ref[...] = (acc_ref[...]
                          + b_ref[...].astype(jnp.float32)).astype(o_ref.dtype)

    return kernel


class PallasLinear:
    """y = embedding @ W^T + b (torch.nn.Linear forward), Pallas-tiled.

    Weight preparation -- transpose (N, K) -> (K, N) and zero-pad to tile
    multiples -- happens once in __init__ (parameter-load time), not per call.
    """

    _TM_CAP = 512  # multiple of 256 (v6e/v7x MXU); also the prep-time budget tm

    def __init__(self, weight, bias, *, mxu_dtype=None, precision=None):
        N, K = weight.shape
        assert bias.shape == (N,)
        self.N, self.K = int(N), int(K)
        self.mxu_dtype = mxu_dtype
        self.precision = precision

        in_isz = jnp.dtype(weight.dtype).itemsize
        vmem_cap = _vmem_capacity_bytes()
        # Working-set budget: half of physical VMEM, capped so a v7x (64 MiB)
        # config also fits comfortably with compiler-internal scratch.
        budget = min(vmem_cap // 2, 48 * 1024 * 1024)

        N_128 = _round_up(self.N, 128)
        K_128 = _round_up(self.K, 128)

        def footprint(tm, tn, tk, ksplit):
            f = 2 * (tm * tk + tk * tn) * in_isz   # double-buffered x & W^T tiles
            f += 2 * tm * tn * in_isz              # double-buffered output tile
            f += 2 * tn * in_isz                   # bias tile
            if ksplit:
                f += tm * tn * 4                   # resident f32 accumulator
            return f

        tm_budget = self._TM_CAP

        # tk: take the whole contraction when modest (gk == 1 -> no accumulator,
        # no epilogue), otherwise a large multiple of 256.
        tk = K_128 if K_128 <= 2048 else 2048
        # tn: largest MXU-friendly tile that fits the budget.
        tn = 128
        for cand in (4096, 2048, 1024, 512, 256, 128):
            if cand > N_128:
                continue
            if footprint(tm_budget, cand, tk, ksplit=(tk < K_128)) <= budget:
                tn = cand
                break
        # If even tn=128 blows the budget (huge single K tile), halve tk.
        while footprint(tm_budget, tn, tk, ksplit=(tk < K_128)) > budget and tk > 512:
            tk = max(512, _round_up(tk // 2, 256))

        # Megacore occupancy (v7x, 2 TCs): for large-N heads avoid a single
        # (i, j) tile in the common small-M (gm == 1) case by keeping gn >= 2.
        if tn >= N_128 and N_128 >= 512:
            tn = _round_up(-(-N_128 // 2), 128)

        N_pad = _round_up(self.N, tn)
        K_pad = _round_up(self.K, tk)

        # One-time weight prep: transpose to (K, N) (folds W^T into the layout,
        # no in-loop transpose), optional bf16 storage, zero-pad to tiles.
        w_dtype = weight.dtype if mxu_dtype is None else mxu_dtype
        wt = weight.T.astype(w_dtype)
        if (K_pad, N_pad) != (self.K, self.N):
            wt = jnp.pad(wt, ((0, K_pad - self.K), (0, N_pad - self.N)))
        b2d = bias
        if N_pad != self.N:
            b2d = jnp.pad(bias, (0, N_pad - self.N))

        self.wt = wt
        self.b2d = b2d.reshape(1, N_pad)
        self.tn, self.tk = tn, tk
        self.N_pad, self.K_pad = N_pad, K_pad
        self.vmem_cap = vmem_cap

    def __call__(self, embedding):
        *lead, K = embedding.shape
        assert K == self.K, (K, self.K)
        x2d = embedding.reshape(-1, K)
        M = x2d.shape[0]

        itemsize = jnp.dtype(embedding.dtype).itemsize
        sub = max(8, 32 // itemsize)  # sublane granularity by dtype

        # tm: cover all of M when modest (gm == 1 -> the N x K weight is read
        # from HBM exactly once); otherwise tile at the cap.
        M_sub = _round_up(M, sub)
        tm = M_sub if M_sub <= self._TM_CAP else self._TM_CAP
        M_pad = _round_up(M, tm)

        tn, tk = self.tn, self.tk
        N_pad, K_pad = self.N_pad, self.K_pad
        gm, gn, gk = M_pad // tm, N_pad // tn, K_pad // tk

        x_p = x2d
        if (M_pad, K_pad) != (M, K):
            x_p = jnp.pad(x2d, ((0, M_pad - M), (0, K_pad - K)))

        # VMEM limit derived from the actual working set (v7x has only 64 MiB).
        w_isz = jnp.dtype(self.wt.dtype).itemsize
        footprint = (2 * (tm * tk * itemsize + tk * tn * w_isz
                          + tm * tn * itemsize)
                     + 2 * tn * itemsize
                     + (tm * tn * 4 if gk > 1 else 0))
        vmem_limit = min(int(self.vmem_cap * 0.9),
                         max(32 * 1024 * 1024, 2 * footprint))

        cost = pl.CostEstimate(
            flops=2 * M_pad * N_pad * K_pad,
            transcendentals=0,
            bytes_accessed=(gn * M_pad * K_pad * itemsize      # x streamed gn times
                            + gm * N_pad * K_pad * w_isz       # W^T streamed gm times
                            + M_pad * N_pad * itemsize
                            + N_pad * itemsize),
        )

        if gk == 1:
            kernel = _make_single_pass_kernel(self.mxu_dtype, self.precision)
            grid = (gm, gn)
            in_specs = [
                pl.BlockSpec((tm, tk), lambda i, j: (i, 0)),   # x rows
                pl.BlockSpec((tk, tn), lambda i, j: (0, j)),   # W^T (K, N)
                pl.BlockSpec((1, tn), lambda i, j: (0, j)),    # bias
            ]
            out_spec = pl.BlockSpec((tm, tn), lambda i, j: (i, j))
            scratch = []
            dims = ("parallel", "parallel")
        else:
            kernel = _make_ksplit_kernel(self.mxu_dtype, self.precision)
            grid = (gm, gn, gk)
            in_specs = [
                pl.BlockSpec((tm, tk), lambda i, j, k: (i, k)),
                pl.BlockSpec((tk, tn), lambda i, j, k: (k, j)),
                pl.BlockSpec((1, tn), lambda i, j, k: (0, j)),
            ]
            out_spec = pl.BlockSpec((tm, tn), lambda i, j, k: (i, j))
            scratch = [pltpu.VMEM((tm, tn), jnp.float32)]
            dims = ("parallel", "parallel", "arbitrary")

        out = pl.pallas_call(
            kernel,
            out_shape=jax.ShapeDtypeStruct((M_pad, N_pad), embedding.dtype),
            grid_spec=pltpu.PrefetchScalarGridSpec(
                num_scalar_prefetch=0,
                grid=grid,
                in_specs=in_specs,
                out_specs=out_spec,
                scratch_shapes=scratch,
            ),
            compiler_params=pltpu.CompilerParams(
                dimension_semantics=dims,
                vmem_limit_bytes=vmem_limit,
            ),
            cost_estimate=cost,
        )(x_p, self.wt, self.b2d)

        out = out[:M, :self.N]
        return out.reshape(*lead, self.N)


def linear_forward(embedding, weight, bias, **kw):
    """Functional convenience wrapper. In a real model, construct PallasLinear
    once at parameter-load time and reuse it (weight transpose/pad are hoisted
    there)."""
    return PallasLinear(weight, bias, **kw)(embedding)


if __name__ == "__main__":
    # Small, deterministic setup consistent with the module's forward:
    # embedding (batch=2, seq=8, hidden=32), label_size=16
    hidden_size, label_size = 32, 16
    batch, seq = 2, 8

    key = jax.random.PRNGKey(0)
    k_x, k_w, k_b = jax.random.split(key, 3)

    embedding = jax.random.normal(k_x, (batch, seq, hidden_size), dtype=jnp.float32)
    # Deterministic parameters (shapes from nn.Linear(hidden_size, label_size)).
    weight = jax.random.normal(k_w, (label_size, hidden_size), dtype=jnp.float32) * 0.02
    bias = jax.random.normal(k_b, (label_size,), dtype=jnp.float32) * 0.02

    # One-time parameter prep (transpose + pad), then forward.
    layer = PallasLinear(weight, bias)
    out = layer(embedding)
    out = jax.block_until_ready(out)

    # Pure-JAX reference check.
    ref = embedding @ weight.T + bias
    assert out.shape == (batch, seq, label_size)
    assert jnp.allclose(out, ref, atol=1e-5, rtol=1e-5)

    print("KERNEL_OK")
</pallas_src>

<mosaic_0001>
module attributes {stable_mosaic.version = 11 : i64} {
  func.func @kernel(%arg0: i32, %arg1: i32, %arg2: memref<16x128xf32, #tpu.memory_space<vmem>>, %arg3: memref<128x128xf32, #tpu.memory_space<vmem>>, %arg4: memref<1x128xf32, #tpu.memory_space<vmem>>, %arg5: memref<16x128xf32, #tpu.memory_space<vmem>>) attributes {dimension_semantics = [#tpu.dimension_semantics<parallel>, #tpu.dimension_semantics<parallel>], iteration_bounds = array<i64: 1, 1>, scalar_prefetch = 0 : i64, scratch_operands = 0 : i64, tpu.core_type = #tpu.core_type<tc>, window_params = [{transform_indices = @transform_0, window_bounds = array<i64: 16, 128>}, {transform_indices = @transform_1, window_bounds = array<i64: 128, 128>}, {transform_indices = @transform_2, window_bounds = array<i64: 1, 128>}, {transform_indices = @transform_3, window_bounds = array<i64: 16, 128>}]} {
    %c0 = arith.constant 0 : index
    %c0_0 = arith.constant 0 : index
    %0 = vector.load %arg2[%c0, %c0_0] : memref<16x128xf32, #tpu.memory_space<vmem>>, vector<16x128xf32>
    %c0_1 = arith.constant 0 : index
    %c0_2 = arith.constant 0 : index
    %1 = vector.load %arg3[%c0_1, %c0_2] : memref<128x128xf32, #tpu.memory_space<vmem>>, vector<128x128xf32>
    %cst = arith.constant dense<0.000000e+00> : vector<16x128xf32>
    %2 = tpu.matmul %0, %1, %cst {dimension_numbers = #tpu.dot_dimension_numbers<[1], [0], [0], [1], [0, 0, 1, 1], [], []>} : vector<16x128xf32>, vector<128x128xf32>, vector<16x128xf32> -> vector<16x128xf32>
    %c0_3 = arith.constant 0 : index
    %c0_4 = arith.constant 0 : index
    %3 = vector.load %arg4[%c0_3, %c0_4] : memref<1x128xf32, #tpu.memory_space<vmem>>, vector<1x128xf32>
    %4 = vector.broadcast %3 : vector<1x128xf32> to vector<16x128xf32>
    %5 = arith.addf %2, %4 : vector<16x128xf32>
    %c0_5 = arith.constant 0 : index
    %c0_6 = arith.constant 0 : index
    %6 = vector.load %arg5[%c0_5, %c0_6] : memref<16x128xf32, #tpu.memory_space<vmem>>, vector<16x128xf32>
    tpu.vector_store %arg5[%c0_5, %c0_6], %5 {strides = array<i32>} : memref<16x128xf32, #tpu.memory_space<vmem>>, vector<16x128xf32>,
    return
  }
  func.func @transform_0(%arg0: i32, %arg1: i32) -> (i32, i32) {
    %c0_i32 = arith.constant 0 : i32
    %c0_i32_0 = arith.constant 0 : i32
    return %arg0, %c0_i32 : i32, i32
  }
  func.func @transform_1(%arg0: i32, %arg1: i32) -> (i32, i32) {
    %c0_i32 = arith.constant 0 : i32
    %c0_i32_0 = arith.constant 0 : i32
    return %c0_i32, %arg1 : i32, i32
  }
  func.func @transform_2(%arg0: i32, %arg1: i32) -> (i32, i32) {
    %c0_i32 = arith.constant 0 : i32
    %c0_i32_0 = arith.constant 0 : i32
    return %c0_i32, %arg1 : i32, i32
  }
  func.func @transform_3(%arg0: i32, %arg1: i32) -> (i32, i32) {
    %c0_i32 = arith.constant 0 : i32
    return %arg0, %arg1 : i32, i32
  }
}

</mosaic_0001>

<llo_original>
// kernel: tpu_custom_call.1
$region0: #{tpu_custom_call.1}
  #allocation0 [shape = 'u32[]', space=smem, size = 0x4, offset = 0x4, fixed_abs, tag = 'smem constant byte address 0x4 - core index']
  #allocation1 [shape = 'u32[144,128]{1,0:T(1,128)}', space=vmem, size = 0x12000, scoped, tag = 'internal scratch']
  %s0 = inlined_call_operand.hbm [shape: f32[16,128], index: 0, kind: input, shape index: {}]
  %s1 = inlined_call_operand.hbm [shape: f32[128,128], index: 1, kind: input, shape index: {}]
  %s2 = inlined_call_operand.vmem [shape: f32[1,128], index: 2, kind: input, shape index: {}]
  %s3 = inlined_call_operand.hbm [shape: f32[16,128], index: 3, kind: output, shape index: {}]
  %s4 = sld [smem:[#allocation0]]
  $region30: #{tpu_custom_call.1} parent=0
    _
  %s6 = ssub.s32 1, %s4
  %s7 = scalar_select 0, %s6, %s4
  $region1: #{tpu_custom_call.1} parent=0
    #allocation2 [shape = 'u8[8192]{0}', space=vmem, size = 0x2000, scoped, tag = 'input window, operand 0, single buffered']
    #allocation3 [shape = 's32[1]{0}', space=sflag, size = 0x4, scoped, tag = 'scoped memory for tpu_custom_call.1']
    #allocation4 [shape = 's32[1]{0}', space=sflag, size = 0x4, scoped, tag = 'scoped memory for tpu_custom_call.1']
    #allocation5 [shape = 'u8[65536]{0}', space=vmem, size = 0x10000, scoped, tag = 'input window, operand 1, single buffered']
    #allocation6 [shape = 's32[1]{0}', space=sflag, size = 0x4, scoped, tag = 'scoped memory for tpu_custom_call.1']
    #allocation7 [shape = 'u8[8192]{0}', space=vmem, size = 0x2000, scoped, tag = 'output window, operand 0, single buffered']
    %8 = vsyncpa [#allocation3], 0
    %9 = vsyncpa [#allocation6], 0
    %10 = vsyncpa [#allocation4], 0
    // Predicated region
    $region2: #{tpu_custom_call.1} parent=1 // pred_check
      _
    $region3: #{tpu_custom_call.1} parent=1 // pred_check_branch
      %12 = sbr.rel (0) target = $region5
    $region4: #{tpu_custom_call.1} parent=1 // pred_region
      %s14 = ssub.s32 256, 256
      %15 = vsyncadd [#allocation3], %s14
      %s16 = sshll.u32 [#allocation2], 4
      %s17 = int_to_ptr.vmem [resolvable:$true] %s16
      %22 = dma.hbm_to_vmem [thread:$0]  %s0, 256, %s17, [#allocation3], 128, 128, 8
    $region5: #{tpu_custom_call.1} parent=1 // pred_fallthru
      _
    // Predicated region
    $region6: #{tpu_custom_call.1} parent=1 // pred_check
      _
    $region7: #{tpu_custom_call.1} parent=1 // pred_check_branch
      %24 = sbr.rel (0) target = $region9
    $region8: #{tpu_custom_call.1} parent=1 // pred_region
      %s26 = ssub.s32 2048, 2048
      %27 = vsyncadd [#allocation6], %s26
      %s28 = sshll.u32 [#allocation5], 4
      %s29 = int_to_ptr.vmem [resolvable:$true] %s28
      %34 = dma.hbm_to_vmem [thread:$0]  %s1, 2048, %s29, [#allocation6], 128, 128, 8
    $region9: #{tpu_custom_call.1} parent=1 // pred_fallthru
      _
    // Predicated region
    $region10: #{tpu_custom_call.1} parent=1 // pred_check
      _
    $region11: #{tpu_custom_call.1} parent=1 // pred_check_branch
      %36 = sbr.rel (0) target = $region13
    $region12: #{tpu_custom_call.1} parent=1 // pred_region
      _
    $region13: #{tpu_custom_call.1} parent=1 // pred_fallthru
      _
    // Predicated region
    $region14: #{tpu_custom_call.1} parent=1 // pred_check
      _
    $region15: #{tpu_custom_call.1} parent=1 // pred_check_branch
      %38 = sbr.rel (0) target = $region17
    $region16: #{tpu_custom_call.1} parent=1 // pred_region
      %39 = dma.done [#allocation3], 256
    $region17: #{tpu_custom_call.1} parent=1 // pred_fallthru
      _
    // Predicated region
    $region18: #{tpu_custom_call.1} parent=1 // pred_check
      _
    $region19: #{tpu_custom_call.1} parent=1 // pred_check_branch
      %41 = sbr.rel (0) target = $region21
    $region20: #{tpu_custom_call.1} parent=1 // pred_region
      %42 = dma.done [#allocation6], 2048
    $region21: #{tpu_custom_call.1} parent=1 // pred_fallthru
      _
    %v43 = vld [vmem:[#allocation2] sm:$0xff]
    %v44 = vld [vmem:[#allocation2 + $0x8] sm:$0xff]
    %v45 = vld [vmem:[#allocation5] sm:$0xff]
    %v46 = vld [vmem:[#allocation5 + $0x8] sm:$0xff]
    %v47 = vld [vmem:[#allocation5 + $0x10] sm:$0xff]
    %v48 = vld [vmem:[#allocation5 + $0x18] sm:$0xff]
    %v49 = vld [vmem:[#allocation5 + $0x20] sm:$0xff]
    %v50 = vld [vmem:[#allocation5 + $0x28] sm:$0xff]
    %v51 = vld [vmem:[#allocation5 + $0x30] sm:$0xff]
    %v52 = vld [vmem:[#allocation5 + $0x38] sm:$0xff]
    %v53 = vld [vmem:[#allocation5 + $0x40] sm:$0xff]
    %v54 = vld [vmem:[#allocation5 + $0x48] sm:$0xff]
    %v55 = vld [vmem:[#allocation5 + $0x50] sm:$0xff]
    %v56 = vld [vmem:[#allocation5 + $0x58] sm:$0xff]
    %v57 = vld [vmem:[#allocation5 + $0x60] sm:$0xff]
    %v58 = vld [vmem:[#allocation5 + $0x68] sm:$0xff]
    %v59 = vld [vmem:[#allocation5 + $0x70] sm:$0xff]
    %v60 = vld [vmem:[#allocation5 + $0x78] sm:$0xff]
    %v61 = vld [vmem:[%s2] sm:$0x1]
    %v63 = vlaneseq
    %v64 = vshrl.u32 %v63, 7
    %v65 = vsub.s32 0, %v64
    %v66 = vrot.slane %v61, %v65
    %68 = vmatprep.subr.mxu0 0.0
    %69 = vmatpush1.msra.mxu0 %v45
    %70 = vmatprep.subr.mxu0 0.0
    %71 = vmatpush1.msra.mxu0 %v46
    %72 = vmatprep.subr.mxu0 0.0
    %73 = vmatpush1.msra.mxu0 %v47
    %74 = vmatprep.subr.mxu0 0.0
    %75 = vmatpush1.msra.mxu0 %v48
    %76 = vmatprep.subr.mxu0 0.0
    %77 = vmatpush1.msra.mxu0 %v49
    %78 = vmatprep.subr.mxu0 0.0
    %79 = vmatpush1.msra.mxu0 %v50
    %80 = vmatprep.subr.mxu0 0.0
    %81 = vmatpush1.msra.mxu0 %v51
    %82 = vmatprep.subr.mxu0 0.0
    %83 = vmatpush1.msra.mxu0 %v52
    %84 = vmatprep.subr.mxu0 0.0
    %85 = vmatpush1.msra.mxu0 %v53
    %86 = vmatprep.subr.mxu0 0.0
    %87 = vmatpush1.msra.mxu0 %v54
    %88 = vmatprep.subr.mxu0 0.0
    %89 = vmatpush1.msra.mxu0 %v55
    %90 = vmatprep.subr.mxu0 0.0
    %91 = vmatpush1.msra.mxu0 %v56
    %92 = vmatprep.subr.mxu0 0.0
    %93 = vmatpush1.msra.mxu0 %v57
    %94 = vmatprep.subr.mxu0 0.0
    %95 = vmatpush1.msra.mxu0 %v58
    %96 = vmatprep.subr.mxu0 0.0
    %97 = vmatpush1.msra.mxu0 %v59
    %98 = vmatprep.subr.mxu0 0.0
    %99 = vmatpush1.msra.mxu0 %v60
    %100 = vmatprep.subr.mxu0 0.0
    %101 = vmatpush1.msra.mxu0 0.0
    %102 = vmatprep.subr.mxu0 0.0
    %103 = vmatpush1.msra.mxu0 0.0
    %104 = vmatprep.subr.mxu0 0.0
    %105 = vmatpush1.msra.mxu0 0.0
    %106 = vmatprep.subr.mxu0 0.0
    %107 = vmatpush1.msra.mxu0 0.0
    %108 = vmatprep.subr.mxu0 0.0
    %109 = vmatpush1.msra.mxu0 0.0
    %110 = vmatprep.subr.mxu0 0.0
    %111 = vmatpush1.msra.mxu0 0.0
    %112 = vmatprep.subr.mxu0 0.0
    %113 = vmatpush1.msra.mxu0 0.0
    %114 = vmatprep.subr.mxu0 0.0
    %115 = vmatpush1.msra.mxu0 0.0
    %116 = vmatprep.subr.mxu0 0.0
    %117 = vmatpush1.msra.mxu0 0.0
    %118 = vmatprep.subr.mxu0 0.0
    %119 = vmatpush1.msra.mxu0 0.0
    %120 = vmatprep.subr.mxu0 0.0
    %121 = vmatpush1.msra.mxu0 0.0
    %122 = vmatprep.subr.mxu0 0.0
    %123 = vmatpush1.msra.mxu0 0.0
    %124 = vmatprep.subr.mxu0 0.0
    %125 = vmatpush1.msra.mxu0 0.0
    %126 = vmatprep.subr.mxu0 0.0
    %127 = vmatpush1.msra.mxu0 0.0
    %128 = vmatprep.subr.mxu0 0.0
    %129 = vmatpush1.msra.mxu0 0.0
    %130 = vmatprep.subr.mxu0 0.0
    %131 = vmatpush1.msra.mxu0 0.0
    %132 = vmatprep.mubr.f32.mxu0 0.0
    %133 = vmatmul.mubr.f32.gmra.mrb[0].mxu0 %v43
    %v134 = vpop.f32.mrb[0].mxu0
    %v135 = vadd.f32 %v66, %v134
    %v136 = vpop.f32.mrb[0].mxu0
    %137 = vmatprep.mubr.f32.mxu0 0.0
    %138 = vmatmul.mubr.f32.gmra.mrb[0].mxu0 %v44
    %v139 = vpop.f32.mrb[0].mxu0
    %v140 = vadd.f32 %v66, %v139
    %v141 = vpop.f32.mrb[0].mxu0
    %142 = vdwg.mxu0
    %143 = vst [vmem:[#allocation7] sm:$0xff] %v135
    %144 = vst [vmem:[#allocation7 + $0x8] sm:$0xff] %v140
    // Predicated region
    $region22: #{tpu_custom_call.1} parent=1 // pred_check
      _
    $region23: #{tpu_custom_call.1} parent=1 // pred_check_branch
      %146 = sbr.rel (0) target = $region25
    $region24: #{tpu_custom_call.1} parent=1 // pred_region
      %s148 = ssub.s32 256, 256
      %149 = vsyncadd [#allocation4], %s148
      %s150 = sshll.u32 [#allocation7], 4
      %s151 = int_to_ptr.vmem [resolvable:$true] %s150
      %156 = dma.vmem_to_hbm [thread:$0]  %s151, 256, %s3, [#allocation4], 128, 128, 8
    $region25: #{tpu_custom_call.1} parent=1 // pred_fallthru
      _
    // Predicated region
    $region26: #{tpu_custom_call.1} parent=1 // pred_check
      _
    $region27: #{tpu_custom_call.1} parent=1 // pred_check_branch
      %158 = sbr.rel (0) target = $region29
    $region28: #{tpu_custom_call.1} parent=1 // pred_region
      %159 = dma.done [#allocation4], 256
    $region29: #{tpu_custom_call.1} parent=1 // pred_fallthru
      _
    %160 = vsyncpa [#allocation3], 1
    %161 = vsyncpa [#allocation6], 1
    %162 = vsyncpa [#allocation4], 1

</llo_original>
